<compile_context>
chip_gen: v7x
topology: tpu7x:2x2x1
jax: 0.10.0
libtpu: 0.0.40
codegen_flags: <defaults>
</compile_context>

<pallas_src>
import functools

import jax
import jax.numpy as jnp
from jax.experimental import pallas as pl
from jax.experimental.pallas import tpu as pltpu


def _round_up(x, m):
    return ((x + m - 1) // m) * m


def _pad2(x, rows, cols):
    r, c = x.shape
    return jnp.pad(x, ((0, rows - r), (0, cols - c)))


def _tpu_generation():
    """Best-effort TPU generation; 0 (conservative settings) if unknown."""
    try:
        kind = jax.devices()[0].device_kind.lower()
    except Exception:
        return 0
    for g in (7, 6, 5, 4, 3, 2):
        if f"v{g}" in kind or f"tpu{g}" in kind:
            return g
    return 0


def _vmem_limit(block_bytes):
    # Double-buffered blocks + headroom, clamped to stay inside v7x's 64 MiB VMEM.
    need = 2 * int(block_bytes) + (8 << 20)
    return int(min(max(need, 32 << 20), 48 << 20))


# ------------------------------------------------------------------ kernels --

def trunk_kernel(y_ref, w1_ref, b1_ref, w2_ref, b2_ref, out_t_ref, *, act_dtype):
    """Trunk MLP on one Q row tile; stores the latent transposed: t^T (P, TQ)."""
    z1 = (jnp.dot(y_ref[...], w1_ref[...], preferred_element_type=jnp.float32)
          + b1_ref[...])
    h = jnp.tanh(z1.astype(act_dtype))
    z2 = (jnp.dot(h.astype(w2_ref.dtype), w2_ref[...],
                  preferred_element_type=jnp.float32)
          + b2_ref[...])
    # Transpose once per trunk tile (f32) so the combine needs no RHS transpose;
    # final tanh in the gen-gated dtype, store bf16 for the MXU combine.
    t_t = jnp.tanh(z2.T.astype(act_dtype))
    out_t_ref[...] = t_t.astype(out_t_ref.dtype)


def branch_combine_kernel(u_ref, w1_ref, b1_ref, w2_ref, b2_ref, t_t_ref,
                          bias_ref, out_ref, *, act_dtype):
    """Fused branch MLP + DeepONet combine on one B row tile.

    out = (tanh(u@W1+b1) @ W2 + b2) @ t^T + bias, f32 accumulation, bf16 store.
    t^T (P, Qp) is VMEM-resident (constant index_map) across all B tiles.
    """
    z1 = (jnp.dot(u_ref[...], w1_ref[...], preferred_element_type=jnp.float32)
          + b1_ref[...])
    h = jnp.tanh(z1.astype(act_dtype))
    b_lat = (jnp.dot(h.astype(w2_ref.dtype), w2_ref[...],
                     preferred_element_type=jnp.float32)
             + b2_ref[...]).astype(jnp.bfloat16)
    out = (jnp.dot(b_lat, t_t_ref[...], preferred_element_type=jnp.float32)
           + bias_ref[0, 0])
    out_ref[...] = out.astype(out_ref.dtype)


# ----------------------------------------------------------------- wrappers --

def _run_trunk(y_p, p, *, tile_q, act_dtype):
    Qp, Dp = y_p.shape
    Hp = p["tw1"].shape[1]
    Pp = p["tw2"].shape[1]
    grid = (Qp // tile_q,)
    block_bytes = ((tile_q * Dp + Dp * Hp + Hp * Pp + Pp * tile_q) * 2
                   + (Hp + Pp) * 4)
    return pl.pallas_call(
        functools.partial(trunk_kernel, act_dtype=act_dtype),
        out_shape=jax.ShapeDtypeStruct((Pp, Qp), jnp.bfloat16),
        grid_spec=pltpu.PrefetchScalarGridSpec(
            num_scalar_prefetch=0,
            grid=grid,
            in_specs=[
                pl.BlockSpec((tile_q, Dp), lambda i: (i, 0)),
                pl.BlockSpec((Dp, Hp), lambda i: (0, 0)),
                pl.BlockSpec((1, Hp), lambda i: (0, 0)),
                pl.BlockSpec((Hp, Pp), lambda i: (0, 0)),
                pl.BlockSpec((1, Pp), lambda i: (0, 0)),
            ],
            out_specs=pl.BlockSpec((Pp, tile_q), lambda i: (0, i)),
        ),
        compiler_params=pltpu.CompilerParams(
            dimension_semantics=("parallel",),
            vmem_limit_bytes=_vmem_limit(block_bytes)),
    )(y_p, p["tw1"], p["tb1"], p["tw2"], p["tb2"])


def _run_branch_combine(u_p, t_lat_t, p, *, tile_b, act_dtype, out_dtype):
    Bp, Mp = u_p.shape
    Hp = p["bw1"].shape[1]
    Pp, Qp = t_lat_t.shape
    grid = (Bp // tile_b,)
    block_bytes = ((tile_b * Mp + Mp * Hp + Hp * Pp + Pp * Qp) * 2
                   + (Hp + Pp + 1) * 4
                   + tile_b * Qp * jnp.dtype(out_dtype).itemsize)
    return pl.pallas_call(
        functools.partial(branch_combine_kernel, act_dtype=act_dtype),
        out_shape=jax.ShapeDtypeStruct((Bp, Qp), out_dtype),
        grid_spec=pltpu.PrefetchScalarGridSpec(
            num_scalar_prefetch=0,
            grid=grid,
            in_specs=[
                pl.BlockSpec((tile_b, Mp), lambda i: (i, 0)),
                pl.BlockSpec((Mp, Hp), lambda i: (0, 0)),
                pl.BlockSpec((1, Hp), lambda i: (0, 0)),
                pl.BlockSpec((Hp, Pp), lambda i: (0, 0)),
                pl.BlockSpec((1, Pp), lambda i: (0, 0)),
                pl.BlockSpec((Pp, Qp), lambda i: (0, 0)),   # resident t^T
                pl.BlockSpec(memory_space=pltpu.MemorySpace.SMEM),
            ],
            out_specs=pl.BlockSpec((tile_b, Qp), lambda i: (i, 0)),
        ),
        compiler_params=pltpu.CompilerParams(
            dimension_semantics=("parallel",),   # >=2 steps feeds both v7x TCs
            vmem_limit_bytes=_vmem_limit(block_bytes)),
    )(u_p, p["bw1"], p["bb1"], p["bw2"], p["bb2"], t_lat_t, p["bias"])


def prepare_deeponet_params(params, *, lane_align=None):
    """Pad + cast weights ONCE (hoisted out of the per-call forward)."""
    if lane_align is None:
        lane_align = 256 if _tpu_generation() >= 6 else 128
    (bw1, bb1, bw2, bb2, tw1, tb1, tw2, tb2, bias) = params
    M, H = bw1.shape
    P = bw2.shape[1]
    D = tw1.shape[0]
    Mp, Dp = _round_up(M, 128), _round_up(D, 128)
    Hp, Pp = _round_up(H, lane_align), _round_up(P, lane_align)
    bf16, f32 = jnp.bfloat16, jnp.float32
    return {
        "bw1": _pad2(bw1, Mp, Hp).astype(bf16),
        "bb1": _pad2(bb1, 1, Hp).astype(f32),
        "bw2": _pad2(bw2, Hp, Pp).astype(bf16),
        "bb2": _pad2(bb2, 1, Pp).astype(f32),
        "tw1": _pad2(tw1, Dp, Hp).astype(bf16),
        "tb1": _pad2(tb1, 1, Hp).astype(f32),
        "tw2": _pad2(tw2, Hp, Pp).astype(bf16),
        "tb2": _pad2(tb2, 1, Pp).astype(f32),
        "bias": jnp.asarray(bias, f32).reshape(1, 1),
    }


def deeponet_forward(u, y, params, *, out_dtype=jnp.bfloat16,
                     row_tile=256, q_tile=512, act_dtype=None):
    """DeepONet: G(u)(y)[b, q] = sum_k branch(u)[b,k] * trunk(y)[q,k] + bias."""
    if act_dtype is None:
        act_dtype = jnp.bfloat16 if _tpu_generation() >= 6 else jnp.float32

    Mp, Hp = params["bw1"].shape
    Pp = params["bw2"].shape[1]
    Dp = params["tw1"].shape[0]

    B, M = u.shape
    Q, D = y.shape
    assert M <= Mp and D <= Dp

    # tile_b multiple of 16 (bf16 row packing), tile_q multiple of 128 (lane-dense).
    tile_b = min(row_tile, _round_up(B, 16))
    tile_q = min(q_tile, _round_up(Q, 128))
    Bp = _round_up(B, tile_b)
    Qp = _round_up(Q, tile_q)

    u_p = _pad2(u, Bp, Mp).astype(jnp.bfloat16)
    y_p = _pad2(y, Qp, Dp).astype(jnp.bfloat16)

    # Trunk runs exactly once; latent stored transposed (Pp, Qp) in bf16.
    t_lat_t = _run_trunk(y_p, params, tile_q=tile_q, act_dtype=act_dtype)
    # Fused branch MLP + combine: no HBM round-trip for the branch latent.
    out_p = _run_branch_combine(u_p, t_lat_t, params, tile_b=tile_b,
                                act_dtype=act_dtype, out_dtype=out_dtype)
    return out_p[:B, :Q]


def deeponet_reference(u, y, params, act_dtype=jnp.float32):
    """Pure-JAX reference using the same bf16-matmul / f32-accum pipeline."""
    (bw1, bb1, bw2, bb2, tw1, tb1, tw2, tb2, bias) = params
    bf16 = jnp.bfloat16

    def mm(a, w):
        return jnp.dot(a.astype(bf16), w.astype(bf16),
                       preferred_element_type=jnp.float32)

    hb = jnp.tanh((mm(u, bw1) + bb1).astype(act_dtype)).astype(bf16)
    b = (mm(hb, bw2) + bb2).astype(bf16)
    ht = jnp.tanh((mm(y, tw1) + tb1).astype(act_dtype)).astype(bf16)
    t = jnp.tanh((mm(ht, tw2) + tb2).astype(act_dtype)).astype(bf16)
    return jnp.dot(b, t.T, preferred_element_type=jnp.float32) + bias[0, 0]


if __name__ == "__main__":
    # Small shapes: B=2 input functions sampled at M=16 sensors, Q=8 query points
    # in D=2 dims, hidden H=32, latent P=32.
    B, M, Q, D, H, P = 2, 16, 8, 2, 32, 32

    key = jax.random.PRNGKey(0)
    ks = jax.random.split(key, 11)

    u = jax.random.normal(ks[0], (B, M), dtype=jnp.float32)
    y = jax.random.normal(ks[1], (Q, D), dtype=jnp.float32)

    def init(k, shape, fan_in):
        return (jax.random.normal(k, shape, dtype=jnp.float32)
                / jnp.sqrt(jnp.float32(fan_in)))

    params = (
        init(ks[2], (M, H), M),            # branch W1
        init(ks[3], (1, H), H),            # branch b1
        init(ks[4], (H, P), H),            # branch W2
        init(ks[5], (1, P), P),            # branch b2
        init(ks[6], (D, H), D),            # trunk W1
        init(ks[7], (1, H), H),            # trunk b1
        init(ks[8], (H, P), H),            # trunk W2
        init(ks[9], (1, P), P),            # trunk b2
        init(ks[10], (1, 1), 1),           # DeepONet output bias b0
    )

    prepared = prepare_deeponet_params(params)       # padded/cast once
    out = deeponet_forward(u, y, prepared)
    jax.block_until_ready(out)

    act_dtype = jnp.bfloat16 if _tpu_generation() >= 6 else jnp.float32
    ref = deeponet_reference(u, y, params, act_dtype=act_dtype)

    assert out.shape == (B, Q)
    assert jnp.allclose(out.astype(jnp.float32), ref, atol=5e-2, rtol=5e-2), \
        "mismatch vs reference"

    print("KERNEL_OK")
</pallas_src>

<mosaic_0001>
module attributes {stable_mosaic.version = 11 : i64} {
  func.func @trunk_kernel(%arg0: i32, %arg1: memref<128x128xbf16, #tpu.memory_space<vmem>>, %arg2: memref<128x128xbf16, #tpu.memory_space<vmem>>, %arg3: memref<1x128xf32, #tpu.memory_space<vmem>>, %arg4: memref<128x128xbf16, #tpu.memory_space<vmem>>, %arg5: memref<1x128xf32, #tpu.memory_space<vmem>>, %arg6: memref<128x128xbf16, #tpu.memory_space<vmem>>) attributes {dimension_semantics = [#tpu.dimension_semantics<parallel>], iteration_bounds = array<i64: 1>, scalar_prefetch = 0 : i64, scratch_operands = 0 : i64, tpu.core_type = #tpu.core_type<tc>, window_params = [{transform_indices = @transform_0, window_bounds = array<i64: 128, 128>}, {pipeline_mode = #tpu.pipeline_mode<synchronous>, transform_indices = @transform_1, window_bounds = array<i64: 128, 128>}, {pipeline_mode = #tpu.pipeline_mode<synchronous>, transform_indices = @transform_2, window_bounds = array<i64: 1, 128>}, {pipeline_mode = #tpu.pipeline_mode<synchronous>, transform_indices = @transform_3, window_bounds = array<i64: 128, 128>}, {pipeline_mode = #tpu.pipeline_mode<synchronous>, transform_indices = @transform_4, window_bounds = array<i64: 1, 128>}, {transform_indices = @transform_5, window_bounds = array<i64: 128, 128>}]} {
    %c0 = arith.constant 0 : index
    %c0_0 = arith.constant 0 : index
    %0 = vector.load %arg1[%c0, %c0_0] : memref<128x128xbf16, #tpu.memory_space<vmem>>, vector<128x128xbf16>
    %c0_1 = arith.constant 0 : index
    %c0_2 = arith.constant 0 : index
    %1 = vector.load %arg2[%c0_1, %c0_2] : memref<128x128xbf16, #tpu.memory_space<vmem>>, vector<128x128xbf16>
    %cst = arith.constant dense<0.000000e+00> : vector<128x128xf32>
    %2 = tpu.matmul %0, %1, %cst {dimension_numbers = #tpu.dot_dimension_numbers<[1], [0], [0], [1], [0, 0, 1, 1], [], []>} : vector<128x128xbf16>, vector<128x128xbf16>, vector<128x128xf32> -> vector<128x128xf32>
    %c0_3 = arith.constant 0 : index
    %c0_4 = arith.constant 0 : index
    %3 = vector.load %arg3[%c0_3, %c0_4] : memref<1x128xf32, #tpu.memory_space<vmem>>, vector<1x128xf32>
    %4 = vector.broadcast %3 : vector<1x128xf32> to vector<128x128xf32>
    %5 = arith.addf %2, %4 : vector<128x128xf32>
    %6 = math.tanh %5 : vector<128x128xf32>
    %7 = arith.truncf %6 : vector<128x128xf32> to vector<128x128xbf16>
    %c0_5 = arith.constant 0 : index
    %c0_6 = arith.constant 0 : index
    %8 = vector.load %arg4[%c0_5, %c0_6] : memref<128x128xbf16, #tpu.memory_space<vmem>>, vector<128x128xbf16>
    %cst_7 = arith.constant dense<0.000000e+00> : vector<128x128xf32>
    %9 = tpu.matmul %7, %8, %cst_7 {dimension_numbers = #tpu.dot_dimension_numbers<[1], [0], [0], [1], [0, 0, 1, 1], [], []>} : vector<128x128xbf16>, vector<128x128xbf16>, vector<128x128xf32> -> vector<128x128xf32>
    %c0_8 = arith.constant 0 : index
    %c0_9 = arith.constant 0 : index
    %10 = vector.load %arg5[%c0_8, %c0_9] : memref<1x128xf32, #tpu.memory_space<vmem>>, vector<1x128xf32>
    %11 = vector.broadcast %10 : vector<1x128xf32> to vector<128x128xf32>
    %12 = arith.addf %9, %11 : vector<128x128xf32>
    %13 = tpu.transpose %12, [1, 0] : vector<128x128xf32> -> vector<128x128xf32>
    %14 = math.tanh %13 : vector<128x128xf32>
    %15 = arith.truncf %14 : vector<128x128xf32> to vector<128x128xbf16>
    %c0_10 = arith.constant 0 : index
    %c0_11 = arith.constant 0 : index
    %16 = vector.load %arg6[%c0_10, %c0_11] : memref<128x128xbf16, #tpu.memory_space<vmem>>, vector<128x128xbf16>
    tpu.vector_store %arg6[%c0_10, %c0_11], %15 {strides = array<i32>} : memref<128x128xbf16, #tpu.memory_space<vmem>>, vector<128x128xbf16>,
    return
  }
  func.func @transform_0(%arg0: i32) -> (i32, i32) {
    %c0_i32 = arith.constant 0 : i32
    %c0_i32_0 = arith.constant 0 : i32
    return %arg0, %c0_i32 : i32, i32
  }
  func.func @transform_1(%arg0: i32) -> (i32, i32) {
    %c0_i32 = arith.constant 0 : i32
    %c0_i32_0 = arith.constant 0 : i32
    %c0_i32_1 = arith.constant 0 : i32
    return %c0_i32, %c0_i32_0 : i32, i32
  }
  func.func @transform_2(%arg0: i32) -> (i32, i32) {
    %c0_i32 = arith.constant 0 : i32
    %c0_i32_0 = arith.constant 0 : i32
    %c0_i32_1 = arith.constant 0 : i32
    return %c0_i32, %c0_i32_0 : i32, i32
  }
  func.func @transform_3(%arg0: i32) -> (i32, i32) {
    %c0_i32 = arith.constant 0 : i32
    %c0_i32_0 = arith.constant 0 : i32
    %c0_i32_1 = arith.constant 0 : i32
    return %c0_i32, %c0_i32_0 : i32, i32
  }
  func.func @transform_4(%arg0: i32) -> (i32, i32) {
    %c0_i32 = arith.constant 0 : i32
    %c0_i32_0 = arith.constant 0 : i32
    %c0_i32_1 = arith.constant 0 : i32
    return %c0_i32, %c0_i32_0 : i32, i32
  }
  func.func @transform_5(%arg0: i32) -> (i32, i32) {
    %c0_i32 = arith.constant 0 : i32
    %c0_i32_0 = arith.constant 0 : i32
    return %c0_i32, %arg0 : i32, i32
  }
}

</mosaic_0001>

<llo_original>
// kernel: tpu_custom_call.1
$region0: #{tpu_custom_call.1}
  #allocation0 [shape = 'u32[]', space=smem, size = 0x4, offset = 0x4, fixed_abs, tag = 'smem constant byte address 0x4 - core index']
  #allocation1 [shape = 'u32[144,128]{1,0:T(1,128)}', space=vmem, size = 0x12000, scoped, tag = 'internal scratch']
  %s0 = inlined_call_operand.hbm [shape: bf16[128,128], index: 0, kind: input, shape index: {}]
  %s1 = inlined_call_operand.hbm [shape: bf16[128,128], index: 1, kind: input, shape index: {}]
  %s2 = inlined_call_operand.vmem [shape: f32[1,128], index: 2, kind: input, shape index: {}]
  %s3 = inlined_call_operand.hbm [shape: bf16[128,128], index: 3, kind: input, shape index: {}]
  %s4 = inlined_call_operand.vmem [shape: f32[1,128], index: 4, kind: input, shape index: {}]
  %s5 = inlined_call_operand.hbm [shape: bf16[128,128], index: 5, kind: output, shape index: {}]
  %s6 = sld [smem:[#allocation0]]
  $region42: #{tpu_custom_call.1} parent=0
    _
  %s8 = ssub.s32 1, %s6
  %s9 = scalar_select 0, %s8, %s6
  $region1: #{tpu_custom_call.1} parent=0
    #allocation2 [shape = 'u8[32768]{0}', space=vmem, size = 0x8000, scoped, tag = 'input window, operand 0, single buffered']
    #allocation3 [shape = 's32[1]{0}', space=sflag, size = 0x4, scoped, tag = 'scoped memory for tpu_custom_call.1']
    #allocation4 [shape = 's32[1]{0}', space=sflag, size = 0x4, scoped, tag = 'scoped memory for tpu_custom_call.1']
    #allocation5 [shape = 'u8[32768]{0}', space=vmem, size = 0x8000, scoped, tag = 'input window, operand 1, single buffered']
    #allocation6 [shape = 's32[1]{0}', space=sflag, size = 0x4, scoped, tag = 'scoped memory for tpu_custom_call.1']
    #allocation7 [shape = 'u8[32768]{0}', space=vmem, size = 0x8000, scoped, tag = 'input window, operand 3, single buffered']
    #allocation8 [shape = 'u8[32768]{0}', space=vmem, size = 0x8000, scoped, tag = 'output window, operand 0, single buffered']
    %10 = vsyncpa [#allocation3], 0
    %11 = vsyncpa [#allocation6], 0
    %12 = vsyncpa [#allocation4], 0
    // Predicated region
    $region2: #{tpu_custom_call.1} parent=1 // pred_check
      _
    $region3: #{tpu_custom_call.1} parent=1 // pred_check_branch
      %14 = sbr.rel (0) target = $region5
    $region4: #{tpu_custom_call.1} parent=1 // pred_region
      %s16 = ssub.s32 1024, 1024
      %17 = vsyncadd [#allocation3], %s16
      %s18 = sshll.u32 [#allocation2], 4
      %s19 = int_to_ptr.vmem [resolvable:$true] %s18
      %24 = dma.hbm_to_vmem [thread:$0]  %s0, 1024, %s19, [#allocation3], 64, 64, 4
    $region5: #{tpu_custom_call.1} parent=1 // pred_fallthru
      _
    // Predicated region
    $region6: #{tpu_custom_call.1} parent=1 // pred_check
      _
    $region7: #{tpu_custom_call.1} parent=1 // pred_check_branch
      %26 = sbr.rel (0) target = $region9
    $region8: #{tpu_custom_call.1} parent=1 // pred_region
      %s28 = ssub.s32 1024, 1024
      %29 = vsyncadd [#allocation6], %s28
      %s30 = sshll.u32 [#allocation5], 4
      %s31 = int_to_ptr.vmem [resolvable:$true] %s30
      %36 = dma.hbm_to_vmem [thread:$0]  %s1, 1024, %s31, [#allocation6], 64, 64, 4
    $region9: #{tpu_custom_call.1} parent=1 // pred_fallthru
      _
    // Predicated region
    $region10: #{tpu_custom_call.1} parent=1 // pred_check
      _
    $region11: #{tpu_custom_call.1} parent=1 // pred_check_branch
      %38 = sbr.rel (0) target = $region13
    $region12: #{tpu_custom_call.1} parent=1 // pred_region
      _
    $region13: #{tpu_custom_call.1} parent=1 // pred_fallthru
      _
    // Predicated region
    $region14: #{tpu_custom_call.1} parent=1 // pred_check
      _
    $region15: #{tpu_custom_call.1} parent=1 // pred_check_branch
      %40 = sbr.rel (0) target = $region17
    $region16: #{tpu_custom_call.1} parent=1 // pred_region
      %s42 = ssub.s32 1024, 1024
      %43 = vsyncadd [#allocation6], %s42
      %s44 = sshll.u32 [#allocation7], 4
      %s45 = int_to_ptr.vmem [resolvable:$true] %s44
      %50 = dma.hbm_to_vmem [thread:$0]  %s3, 1024, %s45, [#allocation6], 64, 64, 4
    $region17: #{tpu_custom_call.1} parent=1 // pred_fallthru
      _
    // Predicated region
    $region18: #{tpu_custom_call.1} parent=1 // pred_check
      _
    $region19: #{tpu_custom_call.1} parent=1 // pred_check_branch
      %52 = sbr.rel (0) target = $region21
    $region20: #{tpu_custom_call.1} parent=1 // pred_region
      _
    $region21: #{tpu_custom_call.1} parent=1 // pred_fallthru
      _
    // Predicated region
    $region22: #{tpu_custom_call.1} parent=1 // pred_check
      _
    $region23: #{tpu_custom_call.1} parent=1 // pred_check_branch
      %54 = sbr.rel (0) target = $region25
    $region24: #{tpu_custom_call.1} parent=1 // pred_region
      %55 = dma.done [#allocation3], 1024
    $region25: #{tpu_custom_call.1} parent=1 // pred_fallthru
      _
    // Predicated region
    $region26: #{tpu_custom_call.1} parent=1 // pred_check
      _
    $region27: #{tpu_custom_call.1} parent=1 // pred_check_branch
      %57 = sbr.rel (0) target = $region29
    $region28: #{tpu_custom_call.1} parent=1 // pred_region
      %58 = dma.done [#allocation6], 1024
    $region29: #{tpu_custom_call.1} parent=1 // pred_fallthru
      _
    // Predicated region
    $region30: #{tpu_custom_call.1} parent=1 // pred_check
      _
    $region31: #{tpu_custom_call.1} parent=1 // pred_check_branch
      %60 = sbr.rel (0) target = $region33
    $region32: #{tpu_custom_call.1} parent=1 // pred_region
      %61 = dma.done [#allocation6], 1024
    $region33: #{tpu_custom_call.1} parent=1 // pred_fallthru
      _
    %v63 = vld [vmem:[#allocation2] sm:$0xf]
    %v64 = vld [vmem:[#allocation2 + $0x4] sm:$0xf]
    %v65 = vld [vmem:[#allocation2 + $0x8] sm:$0xf]
    %v66 = vld [vmem:[#allocation2 + $0xc] sm:$0xf]
    %v67 = vld [vmem:[#allocation2 + $0x10] sm:$0xf]
    %v68 = vld [vmem:[#allocation2 + $0x14] sm:$0xf]
    %v69 = vld [vmem:[#allocation2 + $0x18] sm:$0xf]
    %v70 = vld [vmem:[#allocation2 + $0x1c] sm:$0xf]
    %v71 = vld [vmem:[#allocation2 + $0x20] sm:$0xf]
    %v72 = vld [vmem:[#allocation2 + $0x24] sm:$0xf]
    %v73 = vld [vmem:[#allocation2 + $0x28] sm:$0xf]
    %v74 = vld [vmem:[#allocation2 + $0x2c] sm:$0xf]
    %v75 = vld [vmem:[#allocation2 + $0x30] sm:$0xf]
    %v76 = vld [vmem:[#allocation2 + $0x34] sm:$0xf]
    %v77 = vld [vmem:[#allocation2 + $0x38] sm:$0xf]
    %v78 = vld [vmem:[#allocation2 + $0x3c] sm:$0xf]
    %v79 = vld [vmem:[#allocation5] sm:$0xf]
    %v80 = vld [vmem:[#allocation5 + $0x4] sm:$0xf]
    %v81 = vld [vmem:[#allocation5 + $0x8] sm:$0xf]
    %v82 = vld [vmem:[#allocation5 + $0xc] sm:$0xf]
    %v83 = vld [vmem:[#allocation5 + $0x10] sm:$0xf]
    %v84 = vld [vmem:[#allocation5 + $0x14] sm:$0xf]
    %v85 = vld [vmem:[#allocation5 + $0x18] sm:$0xf]
    %v86 = vld [vmem:[#allocation5 + $0x1c] sm:$0xf]
    %v87 = vld [vmem:[#allocation5 + $0x20] sm:$0xf]
    %v88 = vld [vmem:[#allocation5 + $0x24] sm:$0xf]
    %v89 = vld [vmem:[#allocation5 + $0x28] sm:$0xf]
    %v90 = vld [vmem:[#allocation5 + $0x2c] sm:$0xf]
    %v91 = vld [vmem:[#allocation5 + $0x30] sm:$0xf]
    %v92 = vld [vmem:[#allocation5 + $0x34] sm:$0xf]
    %v93 = vld [vmem:[#allocation5 + $0x38] sm:$0xf]
    %v94 = vld [vmem:[#allocation5 + $0x3c] sm:$0xf]
    %v95 = vld [vmem:[%s2] sm:$0x1]
    %v97 = vlaneseq
    %v98 = vshrl.u32 %v97, 7
    %v99 = vsub.s32 0, %v98
    %v100 = vrot.slane %v95, %v99
    %v118 = vunpack.c.l.b16 %v63
    %v119 = vunpack.c.l.b16 %v64
    %v120 = vunpack.c.l.b16 %v65
    %v121 = vunpack.c.l.b16 %v66
    %v122 = vunpack.c.l.b16 %v67
    %v123 = vunpack.c.l.b16 %v68
    %v124 = vunpack.c.l.b16 %v69
    %v125 = vunpack.c.l.b16 %v70
    %v126 = vunpack.c.l.b16 %v71
    %v127 = vunpack.c.l.b16 %v72
    %v128 = vunpack.c.l.b16 %v73
    %v129 = vunpack.c.l.b16 %v74
    %v130 = vunpack.c.l.b16 %v75
    %v131 = vunpack.c.l.b16 %v76
    %v132 = vunpack.c.l.b16 %v77
    %v133 = vunpack.c.l.b16 %v78
    %v134 = vpack.c.b16 %v119, %v118
    %v135 = vpack.c.b16 %v121, %v120
    %v136 = vpack.c.b16 %v123, %v122
    %v137 = vpack.c.b16 %v125, %v124
    %v138 = vpack.c.b16 %v127, %v126
    %v139 = vpack.c.b16 %v129, %v128
    %v140 = vpack.c.b16 %v131, %v130
    %v141 = vpack.c.b16 %v133, %v132
    %v166 = vunpack.c.l.b16 %v79
    %v167 = vunpack.c.l.b16 %v80
    %v168 = vunpack.c.l.b16 %v81
    %v169 = vunpack.c.l.b16 %v82
    %v170 = vunpack.c.l.b16 %v83
    %v171 = vunpack.c.l.b16 %v84
    %v172 = vunpack.c.l.b16 %v85
    %v173 = vunpack.c.l.b16 %v86
    %v174 = vunpack.c.l.b16 %v87
    %v175 = vunpack.c.l.b16 %v88
    %v176 = vunpack.c.l.b16 %v89
    %v177 = vunpack.c.l.b16 %v90
    %v178 = vunpack.c.l.b16 %v91
    %v179 = vunpack.c.l.b16 %v92
    %v180 = vunpack.c.l.b16 %v93
    %v181 = vunpack.c.l.b16 %v94
    %v182 = vpack.c.b16 %v167, %v166
    %v183 = vpack.c.b16 %v169, %v168
    %v184 = vpack.c.b16 %v171, %v170
    %v185 = vpack.c.b16 %v173, %v172
    %v186 = vpack.c.b16 %v175, %v174
    %v187 = vpack.c.b16 %v177, %v176
    %v188 = vpack.c.b16 %v179, %v178
    %v189 = vpack.c.b16 %v181, %v180
    %198 = vmatprep.subr.bf16.mxu0 0
    %199 = vmatpush1.bf16.msra.mxu0 %v182
    %200 = vmatprep.subr.bf16.mxu0 0
    %201 = vmatpush1.bf16.msra.mxu0 %v183
    %202 = vmatprep.subr.bf16.mxu0 0
    %203 = vmatpush1.bf16.msra.mxu0 %v184
    %204 = vmatprep.subr.bf16.mxu0 0
    %205 = vmatpush1.bf16.msra.mxu0 %v185
    %206 = vmatprep.subr.bf16.mxu0 0
    %207 = vmatpush1.bf16.msra.mxu0 %v186
    %208 = vmatprep.subr.bf16.mxu0 0
    %209 = vmatpush1.bf16.msra.mxu0 %v187
    %210 = vmatprep.subr.bf16.mxu0 0
    %211 = vmatpush1.bf16.msra.mxu0 %v188
    %212 = vmatprep.subr.bf16.mxu0 0
    %213 = vmatpush1.bf16.msra.mxu0 %v189
    %214 = vmatprep.subr.bf16.mxu0 0
    %215 = vmatpush1.bf16.msra.mxu0 0
    %216 = vmatprep.subr.bf16.mxu0 0
    %217 = vmatpush1.bf16.msra.mxu0 0
    %218 = vmatprep.subr.bf16.mxu0 0
    %219 = vmatpush1.bf16.msra.mxu0 0
    %220 = vmatprep.subr.bf16.mxu0 0
    %221 = vmatpush1.bf16.msra.mxu0 0
    %222 = vmatprep.subr.bf16.mxu0 0
    %223 = vmatpush1.bf16.msra.mxu0 0
    %224 = vmatprep.subr.bf16.mxu0 0
    %225 = vmatpush1.bf16.msra.mxu0 0
    %226 = vmatprep.subr.bf16.mxu0 0
    %227 = vmatpush1.bf16.msra.mxu0 0
    %228 = vmatprep.subr.bf16.mxu0 0
    %229 = vmatpush1.bf16.msra.mxu0 0
    %230 = vmatprep.mubr.bf16.mxu0 0
    %231 = vmatmul.mubr.bf16.gmra.mrb[0].mxu0 %v134
    %v232 = vpop.f32.mrb[0].mxu0
    %v233 = vadd.f32 %v100, %v232
    %v234 = vpop.f32.mrb[0].mxu0
    %v235 = vpop.f32.mrb[0].mxu0
    %v236 = vadd.f32 %v100, %v235
    %v237 = vpop.f32.mrb[0].mxu0
    %238 = vmatprep.mubr.bf16.mxu0 0
    %239 = vmatmul.mubr.bf16.gmra.mrb[0].mxu0 %v135
    %v240 = vpop.f32.mrb[0].mxu0
    %v241 = vadd.f32 %v100, %v240
    %v242 = vpop.f32.mrb[0].mxu0
    %v243 = vpop.f32.mrb[0].mxu0
    %v244 = vadd.f32 %v100, %v243
    %v245 = vpop.f32.mrb[0].mxu0
    %246 = vmatprep.mubr.bf16.mxu0 0
    %247 = vmatmul.mubr.bf16.gmra.mrb[0].mxu0 %v136
    %v248 = vpop.f32.mrb[0].mxu0
    %v249 = vadd.f32 %v100, %v248
    %v250 = vpop.f32.mrb[0].mxu0
    %v251 = vpop.f32.mrb[0].mxu0
    %v252 = vadd.f32 %v100, %v251
    %v253 = vpop.f32.mrb[0].mxu0
    %254 = vmatprep.mubr.bf16.mxu0 0
    %255 = vmatmul.mubr.bf16.gmra.mrb[0].mxu0 %v137
    %v256 = vpop.f32.mrb[0].mxu0
    %v257 = vadd.f32 %v100, %v256
    %v258 = vpop.f32.mrb[0].mxu0
    %v259 = vpop.f32.mrb[0].mxu0
    %v260 = vadd.f32 %v100, %v259
    %v261 = vpop.f32.mrb[0].mxu0
    %262 = vmatprep.mubr.bf16.mxu0 0
    %263 = vmatmul.mubr.bf16.gmra.mrb[0].mxu0 %v138
    %v264 = vpop.f32.mrb[0].mxu0
    %v265 = vadd.f32 %v100, %v264
    %v266 = vpop.f32.mrb[0].mxu0
    %v267 = vpop.f32.mrb[0].mxu0
    %v268 = vadd.f32 %v100, %v267
    %v269 = vpop.f32.mrb[0].mxu0
    %270 = vmatprep.mubr.bf16.mxu0 0
    %271 = vmatmul.mubr.bf16.gmra.mrb[0].mxu0 %v139
    %v272 = vpop.f32.mrb[0].mxu0
    %v273 = vadd.f32 %v100, %v272
    %v274 = vpop.f32.mrb[0].mxu0
    %v275 = vpop.f32.mrb[0].mxu0
    %v276 = vadd.f32 %v100, %v275
    %v277 = vpop.f32.mrb[0].mxu0
    %278 = vmatprep.mubr.bf16.mxu0 0
    %279 = vmatmul.mubr.bf16.gmra.mrb[0].mxu0 %v140
    %v280 = vpop.f32.mrb[0].mxu0
    %v281 = vadd.f32 %v100, %v280
    %v282 = vpop.f32.mrb[0].mxu0
    %v283 = vpop.f32.mrb[0].mxu0
    %v284 = vadd.f32 %v100, %v283
    %v285 = vpop.f32.mrb[0].mxu0
    %286 = vmatprep.mubr.bf16.mxu0 0
    %287 = vmatmul.mubr.bf16.gmra.mrb[0].mxu0 %v141
    %v288 = vpop.f32.mrb[0].mxu0
    %v289 = vadd.f32 %v100, %v288
    %v290 = vpop.f32.mrb[0].mxu0
    %v291 = vpop.f32.mrb[0].mxu0
    %v292 = vadd.f32 %v100, %v291
    %v293 = vpop.f32.mrb[0].mxu0
    %294 = vdwg.mxu0
    %v295 = vtanh.pop %v233
    %v296 = vtanh.pop %v236
    %v297 = vtanh.pop %v241
    %v298 = vtanh.pop %v244
    %v299 = vtanh.pop %v249
    %v300 = vtanh.pop %v252
    %v301 = vtanh.pop %v257
    %v302 = vtanh.pop %v260
    %v303 = vtanh.pop %v265
    %v304 = vtanh.pop %v268
    %v305 = vtanh.pop %v273
    %v306 = vtanh.pop %v276
    %v307 = vtanh.pop %v281
    %v308 = vtanh.pop %v284
    %v309 = vtanh.pop %v289
    %v310 = vtanh.pop %v292
    %v311 = vpack.c.bf16 %v296, %v295
    %v312 = vpack.c.bf16 %v298, %v297
    %v313 = vpack.c.bf16 %v300, %v299
    %v314 = vpack.c.bf16 %v302, %v301
    %v315 = vpack.c.bf16 %v304, %v303
    %v316 = vpack.c.bf16 %v306, %v305
    %v317 = vpack.c.bf16 %v308, %v307
    %v318 = vpack.c.bf16 %v310, %v309
    %v319 = vld [vmem:[#allocation7] sm:$0xf]
    %v320 = vld [vmem:[#allocation7 + $0x4] sm:$0xf]
    %v321 = vld [vmem:[#allocation7 + $0x8] sm:$0xf]
    %v322 = vld [vmem:[#allocation7 + $0xc] sm:$0xf]
    %v323 = vld [vmem:[#allocation7 + $0x10] sm:$0xf]
    %v324 = vld [vmem:[#allocation7 + $0x14] sm:$0xf]
    %v325 = vld [vmem:[#allocation7 + $0x18] sm:$0xf]
    %v326 = vld [vmem:[#allocation7 + $0x1c] sm:$0xf]
    %v327 = vld [vmem:[#allocation7 + $0x20] sm:$0xf]
    %v328 = vld [vmem:[#allocation7 + $0x24] sm:$0xf]
    %v329 = vld [vmem:[#allocation7 + $0x28] sm:$0xf]
    %v330 = vld [vmem:[#allocation7 + $0x2c] sm:$0xf]
    %v331 = vld [vmem:[#allocation7 + $0x30] sm:$0xf]
    %v332 = vld [vmem:[#allocation7 + $0x34] sm:$0xf]
    %v333 = vld [vmem:[#allocation7 + $0x38] sm:$0xf]
    %v334 = vld [vmem:[#allocation7 + $0x3c] sm:$0xf]
    %v335 = vld [vmem:[%s4] sm:$0x1]
    %v337 = vlaneseq
    %v338 = vshrl.u32 %v337, 7
    %v339 = vsub.s32 0, %v338
    %v340 = vrot.slane %v335, %v339
    %v358 = vunpack.c.l.b16 %v319
    %v359 = vunpack.c.l.b16 %v320
    %v360 = vunpack.c.l.b16 %v321
    %v361 = vunpack.c.l.b16 %v322
    %v362 = vunpack.c.l.b16 %v323
    %v363 = vunpack.c.l.b16 %v324
    %v364 = vunpack.c.l.b16 %v325
    %v365 = vunpack.c.l.b16 %v326
    %v366 = vunpack.c.l.b16 %v327
    %v367 = vunpack.c.l.b16 %v328
    %v368 = vunpack.c.l.b16 %v329
    %v369 = vunpack.c.l.b16 %v330
    %v370 = vunpack.c.l.b16 %v331
    %v371 = vunpack.c.l.b16 %v332
    %v372 = vunpack.c.l.b16 %v333
    %v373 = vunpack.c.l.b16 %v334
    %v374 = vpack.c.b16 %v359, %v358
    %v375 = vpack.c.b16 %v361, %v360
    %v376 = vpack.c.b16 %v363, %v362
    %v377 = vpack.c.b16 %v365, %v364
    %v378 = vpack.c.b16 %v367, %v366
    %v379 = vpack.c.b16 %v369, %v368
    %v380 = vpack.c.b16 %v371, %v370
    %v381 = vpack.c.b16 %v373, %v372
    %390 = vmatprep.subr.bf16.mxu0 0
    %391 = vmatpush1.bf16.msra.mxu0 %v374
    %392 = vmatprep.subr.bf16.mxu0 0
    %393 = vmatpush1.bf16.msra.mxu0 %v375
    %394 = vmatprep.subr.bf16.mxu0 0
    %395 = vmatpush1.bf16.msra.mxu0 %v376
    %396 = vmatprep.subr.bf16.mxu0 0
    %397 = vmatpush1.bf16.msra.mxu0 %v377
    %398 = vmatprep.subr.bf16.mxu0 0
    %399 = vmatpush1.bf16.msra.mxu0 %v378
    %400 = vmatprep.subr.bf16.mxu0 0
    %401 = vmatpush1.bf16.msra.mxu0 %v379
    %402 = vmatprep.subr.bf16.mxu0 0
    %403 = vmatpush1.bf16.msra.mxu0 %v380
    %404 = vmatprep.subr.bf16.mxu0 0
    %405 = vmatpush1.bf16.msra.mxu0 %v381
    %406 = vmatprep.subr.bf16.mxu0 0
    %407 = vmatpush1.bf16.msra.mxu0 0
    %408 = vmatprep.subr.bf16.mxu0 0
    %409 = vmatpush1.bf16.msra.mxu0 0
    %410 = vmatprep.subr.bf16.mxu0 0
    %411 = vmatpush1.bf16.msra.mxu0 0
    %412 = vmatprep.subr.bf16.mxu0 0
    %413 = vmatpush1.bf16.msra.mxu0 0
    %414 = vmatprep.subr.bf16.mxu0 0
    %415 = vmatpush1.bf16.msra.mxu0 0
    %416 = vmatprep.subr.bf16.mxu0 0
    %417 = vmatpush1.bf16.msra.mxu0 0
    %418 = vmatprep.subr.bf16.mxu0 0
    %419 = vmatpush1.bf16.msra.mxu0 0
    %420 = vmatprep.subr.bf16.mxu0 0
    %421 = vmatpush1.bf16.msra.mxu0 0
    %422 = vmatprep.mubr.bf16.mxu0 0
    %423 = vmatmul.mubr.bf16.gmra.mrb[0].mxu0 %v311
    %v424 = vpop.f32.mrb[0].mxu0
    %v425 = vadd.f32 %v340, %v424
    %v426 = vpop.f32.mrb[0].mxu0
    %v427 = vpop.f32.mrb[0].mxu0
    %v428 = vadd.f32 %v340, %v427
    %v429 = vpop.f32.mrb[0].mxu0
    %430 = vmatprep.mubr.bf16.mxu0 0
    %431 = vmatmul.mubr.bf16.gmra.mrb[0].mxu0 %v312
    %v432 = vpop.f32.mrb[0].mxu0
    %v433 = vadd.f32 %v340, %v432
    %v434 = vpop.f32.mrb[0].mxu0
    %v435 = vpop.f32.mrb[0].mxu0
    %v436 = vadd.f32 %v340, %v435
    %v437 = vpop.f32.mrb[0].mxu0
    %438 = vmatprep.mubr.bf16.mxu0 0
    %439 = vmatmul.mubr.bf16.gmra.mrb[0].mxu0 %v313
    %v440 = vpop.f32.mrb[0].mxu0
    %v441 = vadd.f32 %v340, %v440
    %v442 = vpop.f32.mrb[0].mxu0
    %v443 = vpop.f32.mrb[0].mxu0
    %v444 = vadd.f32 %v340, %v443
    %v445 = vpop.f32.mrb[0].mxu0
    %446 = vmatprep.mubr.bf16.mxu0 0
    %447 = vmatmul.mubr.bf16.gmra.mrb[0].mxu0 %v314
    %v448 = vpop.f32.mrb[0].mxu0
    %v449 = vadd.f32 %v340, %v448
    %v450 = vpop.f32.mrb[0].mxu0
    %v451 = vpop.f32.mrb[0].mxu0
    %v452 = vadd.f32 %v340, %v451
    %v453 = vpop.f32.mrb[0].mxu0
    %454 = vmatprep.mubr.bf16.mxu0 0
    %455 = vmatmul.mubr.bf16.gmra.mrb[0].mxu0 %v315
    %v456 = vpop.f32.mrb[0].mxu0
    %v457 = vadd.f32 %v340, %v456
    %v458 = vpop.f32.mrb[0].mxu0
    %v459 = vpop.f32.mrb[0].mxu0
    %v460 = vadd.f32 %v340, %v459
    %v461 = vpop.f32.mrb[0].mxu0
    %462 = vmatprep.mubr.bf16.mxu0 0
    %463 = vmatmul.mubr.bf16.gmra.mrb[0].mxu0 %v316
    %v464 = vpop.f32.mrb[0].mxu0
    %v465 = vadd.f32 %v340, %v464
    %v466 = vpop.f32.mrb[0].mxu0
    %v467 = vpop.f32.mrb[0].mxu0
    %v468 = vadd.f32 %v340, %v467
    %v469 = vpop.f32.mrb[0].mxu0
    %470 = vmatprep.mubr.bf16.mxu0 0
    %471 = vmatmul.mubr.bf16.gmra.mrb[0].mxu0 %v317
    %v472 = vpop.f32.mrb[0].mxu0
    %v473 = vadd.f32 %v340, %v472
    %v474 = vpop.f32.mrb[0].mxu0
    %v475 = vpop.f32.mrb[0].mxu0
    %v476 = vadd.f32 %v340, %v475
    %v477 = vpop.f32.mrb[0].mxu0
    %478 = vmatprep.mubr.bf16.mxu0 0
    %479 = vmatmul.mubr.bf16.gmra.mrb[0].mxu0 %v318
    %v480 = vpop.f32.mrb[0].mxu0
    %v481 = vadd.f32 %v340, %v480
    %v482 = vpop.f32.mrb[0].mxu0
    %v483 = vpop.f32.mrb[0].mxu0
    %v484 = vadd.f32 %v340, %v483
    %v485 = vpop.f32.mrb[0].mxu0
    %486 = vdwg.mxu0
    %487 = vxpose.xlu0.b32.start [1/16] %v425, 128
    %488 = vxpose.xlu0.b32.cont [2/16] %v428, 128
    %489 = vxpose.xlu0.b32.cont [3/16] %v433, 128
    %490 = vxpose.xlu0.b32.cont [4/16] %v436, 128
    %491 = vxpose.xlu0.b32.cont [5/16] %v441, 128
    %492 = vxpose.xlu0.b32.cont [6/16] %v444, 128
    %493 = vxpose.xlu0.b32.cont [7/16] %v449, 128
    %494 = vxpose.xlu0.b32.cont [8/16] %v452, 128
    %495 = vxpose.xlu0.b32.cont [9/16] %v457, 128
    %496 = vxpose.xlu0.b32.cont [10/16] %v460, 128
    %497 = vxpose.xlu0.b32.cont [11/16] %v465, 128
    %498 = vxpose.xlu0.b32.cont [12/16] %v468, 128
    %499 = vxpose.xlu0.b32.cont [13/16] %v473, 128
    %500 = vxpose.xlu0.b32.cont [14/16] %v476, 128
    %501 = vxpose.xlu0.b32.cont [15/16] %v481, 128
    %502 = vxpose.xlu0.b32.end [16/16] %v484, 128
    %v503 = vpop.trf.xlu0
    %v504 = vpop.trf.xlu0
    %v505 = vpop.trf.xlu0
    %v506 = vpop.trf.xlu0
    %v507 = vpop.trf.xlu0
    %v508 = vpop.trf.xlu0
    %v509 = vpop.trf.xlu0
    %v510 = vpop.trf.xlu0
    %v511 = vpop.trf.xlu0
    %v512 = vpop.trf.xlu0
    %v513 = vpop.trf.xlu0
    %v514 = vpop.trf.xlu0
    %v515 = vpop.trf.xlu0
    %v516 = vpop.trf.xlu0
    %v517 = vpop.trf.xlu0
    %v518 = vpop.trf.xlu0
    %v519 = vtanh.pop %v503
    %v520 = vtanh.pop %v504
    %v521 = vtanh.pop %v505
    %v522 = vtanh.pop %v506
    %v523 = vtanh.pop %v507
    %v524 = vtanh.pop %v508
    %v525 = vtanh.pop %v509
    %v526 = vtanh.pop %v510
    %v527 = vtanh.pop %v511
    %v528 = vtanh.pop %v512
    %v529 = vtanh.pop %v513
    %v530 = vtanh.pop %v514
    %v531 = vtanh.pop %v515
    %v532 = vtanh.pop %v516
    %v533 = vtanh.pop %v517
    %v534 = vtanh.pop %v518
    %v535 = vpack.c.bf16 %v520, %v519
    %v536 = vpack.c.bf16 %v522, %v521
    %v537 = vpack.c.bf16 %v524, %v523
    %v538 = vpack.c.bf16 %v526, %v525
    %v539 = vpack.c.bf16 %v528, %v527
    %v540 = vpack.c.bf16 %v530, %v529
    %v541 = vpack.c.bf16 %v532, %v531
    %v542 = vpack.c.bf16 %v534, %v533
    %v551 = vunpack.c.l.b16 %v535
    %v552 = vunpack.c.h.b16 %v535
    %v553 = vunpack.c.l.b16 %v536
    %v554 = vunpack.c.h.b16 %v536
    %v555 = vunpack.c.l.b16 %v537
    %v556 = vunpack.c.h.b16 %v537
    %v557 = vunpack.c.l.b16 %v538
    %v558 = vunpack.c.h.b16 %v538
    %v559 = vunpack.c.l.b16 %v539
    %v560 = vunpack.c.h.b16 %v539
    %v561 = vunpack.c.l.b16 %v540
    %v562 = vunpack.c.h.b16 %v540
    %v563 = vunpack.c.l.b16 %v541
    %v564 = vunpack.c.h.b16 %v541
    %v565 = vunpack.c.l.b16 %v542
    %v566 = vunpack.c.h.b16 %v542
    %v567 = vpack.c.b16 %v551, %v551
    %v568 = vpack.c.b16 %v552, %v552
    %v569 = vpack.c.b16 %v553, %v553
    %v570 = vpack.c.b16 %v554, %v554
    %v571 = vpack.c.b16 %v555, %v555
    %v572 = vpack.c.b16 %v556, %v556
    %v573 = vpack.c.b16 %v557, %v557
    %v574 = vpack.c.b16 %v558, %v558
    %v575 = vpack.c.b16 %v559, %v559
    %v576 = vpack.c.b16 %v560, %v560
    %v577 = vpack.c.b16 %v561, %v561
    %v578 = vpack.c.b16 %v562, %v562
    %v579 = vpack.c.b16 %v563, %v563
    %v580 = vpack.c.b16 %v564, %v564
    %v581 = vpack.c.b16 %v565, %v565
    %v582 = vpack.c.b16 %v566, %v566
    %599 = vst [vmem:[#allocation8] sm:$0xf] %v567
    %600 = vst [vmem:[#allocation8 + $0x4] sm:$0xf] %v568
    %601 = vst [vmem:[#allocation8 + $0x8] sm:$0xf] %v569
    %602 = vst [vmem:[#allocation8 + $0xc] sm:$0xf] %v570
    %603 = vst [vmem:[#allocation8 + $0x10] sm:$0xf] %v571
    %604 = vst [vmem:[#allocation8 + $0x14] sm:$0xf] %v572
    %605 = vst [vmem:[#allocation8 + $0x18] sm:$0xf] %v573
    %606 = vst [vmem:[#allocation8 + $0x1c] sm:$0xf] %v574
    %607 = vst [vmem:[#allocation8 + $0x20] sm:$0xf] %v575
    %608 = vst [vmem:[#allocation8 + $0x24] sm:$0xf] %v576
    %609 = vst [vmem:[#allocation8 + $0x28] sm:$0xf] %v577
    %610 = vst [vmem:[#allocation8 + $0x2c] sm:$0xf] %v578
    %611 = vst [vmem:[#allocation8 + $0x30] sm:$0xf] %v579
    %612 = vst [vmem:[#allocation8 + $0x34] sm:$0xf] %v580
    %613 = vst [vmem:[#allocation8 + $0x38] sm:$0xf] %v581
    %614 = vst [vmem:[#allocation8 + $0x3c] sm:$0xf] %v582
    // Predicated region
    $region34: #{tpu_custom_call.1} parent=1 // pred_check
      _
    $region35: #{tpu_custom_call.1} parent=1 // pred_check_branch
      %616 = sbr.rel (0) target = $region37
    $region36: #{tpu_custom_call.1} parent=1 // pred_region
      %s618 = ssub.s32 1024, 1024
      %619 = vsyncadd [#allocation4], %s618
      %s620 = sshll.u32 [#allocation8], 4
      %s621 = int_to_ptr.vmem [resolvable:$true] %s620
      %626 = dma.vmem_to_hbm [thread:$0]  %s621, 1024, %s5, [#allocation4], 64, 64, 4
    $region37: #{tpu_custom_call.1} parent=1 // pred_fallthru
      _
    // Predicated region
    $region38: #{tpu_custom_call.1} parent=1 // pred_check
      _
    $region39: #{tpu_custom_call.1} parent=1 // pred_check_branch
      %628 = sbr.rel (0) target = $region41
    $region40: #{tpu_custom_call.1} parent=1 // pred_region
      %629 = dma.done [#allocation4], 1024
    $region41: #{tpu_custom_call.1} parent=1 // pred_fallthru
      _
    %630 = vsyncpa [#allocation3], 1
    %631 = vsyncpa [#allocation6], 1
    %632 = vsyncpa [#allocation4], 1

</llo_original>
